<compile_context>
chip_gen: v7x
topology: tpu7x:2x2x1
jax: 0.10.0
libtpu: 0.0.40
codegen_flags: <defaults>
</compile_context>

<pallas_src>
import functools
import math

import jax
import jax.numpy as jnp
from jax import lax
from jax.experimental import pallas as pl
from jax.experimental.pallas import tpu as pltpu


# --------------------------------------------------------------------------- #
# Stage 1: hoisted K / V projection (full-width matmuls, resident weights)
# --------------------------------------------------------------------------- #
def _kv_project_kernel(k_ref, v_ref, wk_ref, bk_ref, wv_ref, bv_ref,
                       ko_ref, vo_ref, *, h, d_k):
    """grid = (batch, seq_tile).  One full-width projection per tensor per
    tile; heads split with static slices into the (h, ts, d_k) output block."""
    k_full = (jnp.dot(k_ref[...], wk_ref[...],
                      preferred_element_type=jnp.float32) + bk_ref[...])
    v_full = (jnp.dot(v_ref[...], wv_ref[...],
                      preferred_element_type=jnp.float32) + bv_ref[...])
    for head in range(h):                              # static unroll over heads
        sl = slice(head * d_k, (head + 1) * d_k)
        ko_ref[head] = k_full[:, sl].astype(ko_ref.dtype)
        vo_ref[head] = v_full[:, sl].astype(vo_ref.dtype)


def _project_kv(k, v, wk_t, bk, wv_t, bv, *, h, d_k, ts, compute_dtype,
                vmem_limit_bytes=None):
    B, S, D = k.shape
    n_s = S // ts
    const_w = lambda b, si: (0, 0)                     # grid-invariant residents
    return pl.pallas_call(
        functools.partial(_kv_project_kernel, h=h, d_k=d_k),
        out_shape=(jax.ShapeDtypeStruct((B, h, S, d_k), compute_dtype),
                   jax.ShapeDtypeStruct((B, h, S, d_k), compute_dtype)),
        grid_spec=pltpu.PrefetchScalarGridSpec(
            num_scalar_prefetch=0,
            grid=(B, n_s),
            in_specs=[
                pl.BlockSpec((None, ts, D), lambda b, si: (b, si, 0)),   # k tile
                pl.BlockSpec((None, ts, D), lambda b, si: (b, si, 0)),   # v tile
                pl.BlockSpec((D, D), const_w),                           # Wk^T
                pl.BlockSpec((1, D), const_w),                           # bk
                pl.BlockSpec((D, D), const_w),                           # Wv^T
                pl.BlockSpec((1, D), const_w),                           # bv
            ],
            out_specs=[
                pl.BlockSpec((None, h, ts, d_k), lambda b, si: (b, 0, si, 0)),
                pl.BlockSpec((None, h, ts, d_k), lambda b, si: (b, 0, si, 0)),
            ]),
        compiler_params=pltpu.CompilerParams(
            dimension_semantics=("parallel", "parallel"),
            vmem_limit_bytes=vmem_limit_bytes),
    )(k, v, wk_t, bk, wv_t, bv)


# --------------------------------------------------------------------------- #
# Stage 2: flash attention + fused Q projection + fused output projection
# --------------------------------------------------------------------------- #
def _flash_mha_kernel(q_ref, kp_ref, vp_ref, wq_ref, bq_ref, wo_ref, bo_ref,
                      o_ref,
                      qh_scr, m_scr, l_scr, acc_scr, out_scr,
                      *, inv_sqrt_dk, h, d_k, exp_dtype):
    """grid = (batch, q_tile, head, kv_tile)."""
    hh = pl.program_id(2)
    ki = pl.program_id(3)
    n_h = pl.num_programs(2)
    n_kv = pl.num_programs(3)

    # ---- once per (batch, q-tile): full-width Q projection for ALL heads ----
    @pl.when(jnp.logical_and(hh == 0, ki == 0))
    def _():
        q_full = (jnp.dot(q_ref[...], wq_ref[...],
                          preferred_element_type=jnp.float32)
                  + bq_ref[...]) * inv_sqrt_dk                     # (tq, D) f32
        for head in range(h):                                      # static unroll
            sl = slice(head * d_k, (head + 1) * d_k)
            qh_scr[head] = q_full[:, sl].astype(qh_scr.dtype)
        out_scr[...] = jnp.zeros_like(out_scr)

    # ---- per (q-tile, head): reset flash state -------------------------------
    @pl.when(ki == 0)
    def _():
        m_scr[...] = jnp.full(m_scr.shape, -jnp.inf, m_scr.dtype)
        l_scr[...] = jnp.zeros_like(l_scr)
        acc_scr[...] = jnp.zeros_like(acc_scr)

    q_h = qh_scr[hh]                                               # (tq, d_k)
    k_h = kp_ref[...]                                              # (tk, d_k)
    v_h = vp_ref[...]                                              # (tk, d_k)

    # scores: contract d_k (last dims) — no transpose needed
    s = lax.dot_general(q_h, k_h, (((1,), (1,)), ((), ())),
                        preferred_element_type=jnp.float32)        # (tq, tk)

    # ---- online (flash) softmax update ---------------------------------------
    m_prev = m_scr[...]
    m_new = jnp.maximum(m_prev, jnp.max(s, axis=-1, keepdims=True))
    alpha = jnp.exp(m_prev - m_new)                                # (tq, 1) f32
    p = jnp.exp((s - m_new).astype(exp_dtype))                     # bf16 exp on v6e/v7x
    l_scr[...] = alpha * l_scr[...] + jnp.sum(p.astype(jnp.float32),
                                              axis=-1, keepdims=True)
    acc_scr[...] = alpha * acc_scr[...] + jnp.dot(
        p.astype(v_h.dtype), v_h, preferred_element_type=jnp.float32)
    m_scr[...] = m_new

    # ---- head finished: normalize (exact recip) and fold through Wo slice ----
    @pl.when(ki == n_kv - 1)
    def _():
        ctx = acc_scr[...] * (1.0 / l_scr[...])                    # (tq, d_k) f32
        out_scr[...] += jnp.dot(ctx.astype(wo_ref.dtype), wo_ref[hh],
                                preferred_element_type=jnp.float32)

    # ---- very last step for this (batch, q-tile): add bias, emit output ------
    @pl.when(jnp.logical_and(hh == n_h - 1, ki == n_kv - 1))
    def _():
        o_ref[...] = (out_scr[...] + bo_ref[...]).astype(o_ref.dtype)


def multi_headed_attention(q, k, v, params, *, h,
                           compute_dtype=jnp.bfloat16,
                           exp_dtype=None,
                           tq=None, tk=None, ts=None,
                           vmem_limit_bytes=None):
    """q, k, v: (B, S, D). params: PyTorch-layout Linear weights/biases."""
    B, S, D = q.shape
    assert D % h == 0, "d_model must be divisible by h"
    d_k = D // h
    out_dtype = q.dtype
    cd = compute_dtype
    exp_dtype = cd if exp_dtype is None else exp_dtype  # use f32 on v5e (no bf16 EUP)

    # Tile sizes: full-extent at toy sizes, capped for production sequences.
    # Per-generation guidance: v5e tq=128-256/tk=256-512 (bf16 compute, small
    # scoped VMEM); v6e can raise tk to 1024 with vmem_limit_bytes; v7x keep
    # defaults (64 MiB physical VMEM).  With K/V hoisted the streamed tiles
    # are only (tk, d_k), so these defaults fit the 32 MiB scoped default.
    if tq is None:
        tq = S if S <= 256 else 256
    if tk is None:
        tk = S if S <= 512 else 512
    if ts is None:
        ts = S if S <= 512 else 512
    assert S % tq == 0 and S % tk == 0 and S % ts == 0, \
        "S must be divisible by the tiles"
    # TODO(synk): pad S (and mask padded keys) to support non-divisible tiles.
    n_q, n_kv = S // tq, S // tk

    # PyTorch Linear: y = x @ W^T + b.  Pre-transpose once on the host.
    wq_t = params["wq"].T.astype(cd)
    wk_t = params["wk"].T.astype(cd)
    wv_t = params["wv"].T.astype(cd)
    bq = params["bq"].reshape(1, D).astype(jnp.float32)
    bk = params["bk"].reshape(1, D).astype(jnp.float32)
    bv = params["bv"].reshape(1, D).astype(jnp.float32)
    wo_h = params["wo"].T.reshape(h, d_k, D).astype(cd)   # per-head Wo slices
    bo = params["bo"].reshape(1, D).astype(jnp.float32)

    # ---- Stage 1: hoisted K/V projection -> (B, h, S, d_k) -------------------
    k_proj, v_proj = _project_kv(k.astype(cd), v.astype(cd),
                                 wk_t, bk, wv_t, bv,
                                 h=h, d_k=d_k, ts=ts, compute_dtype=cd,
                                 vmem_limit_bytes=vmem_limit_bytes)

    # ---- Stage 2: flash attention grid ---------------------------------------
    const2 = lambda b, qi, hh, ki: (0, 0)      # grid-invariant residents
    const3 = lambda b, qi, hh, ki: (0, 0, 0)

    kernel = functools.partial(_flash_mha_kernel,
                               inv_sqrt_dk=1.0 / math.sqrt(d_k),
                               h=h, d_k=d_k, exp_dtype=exp_dtype)

    return pl.pallas_call(
        kernel,
        out_shape=jax.ShapeDtypeStruct((B, S, D), out_dtype),
        grid_spec=pltpu.PrefetchScalarGridSpec(
            num_scalar_prefetch=0,
            grid=(B, n_q, h, n_kv),
            in_specs=[
                pl.BlockSpec((None, tq, D),
                             lambda b, qi, hh, ki: (b, qi, 0)),        # raw Q tile
                pl.BlockSpec((None, None, tk, d_k),
                             lambda b, qi, hh, ki: (b, hh, ki, 0)),    # K_proj tile
                pl.BlockSpec((None, None, tk, d_k),
                             lambda b, qi, hh, ki: (b, hh, ki, 0)),    # V_proj tile
                pl.BlockSpec((D, D), const2),                          # Wq^T (resident)
                pl.BlockSpec((1, D), const2),                          # bq   (resident)
                pl.BlockSpec((h, d_k, D), const3),                     # Wo slices (resident)
                pl.BlockSpec((1, D), const2),                          # bo   (resident)
            ],
            out_specs=pl.BlockSpec((None, tq, D),
                                   lambda b, qi, hh, ki: (b, qi, 0)),
            scratch_shapes=[
                pltpu.VMEM((h, tq, d_k), cd),          # scaled projected Q, all heads
                pltpu.VMEM((tq, 1), jnp.float32),      # running max
                pltpu.VMEM((tq, 1), jnp.float32),      # running denominator
                pltpu.VMEM((tq, d_k), jnp.float32),    # running context numerator
                pltpu.VMEM((tq, D), jnp.float32),      # output-projection accumulator
            ]),
        compiler_params=pltpu.CompilerParams(
            dimension_semantics=("parallel", "parallel", "arbitrary", "arbitrary"),
            vmem_limit_bytes=vmem_limit_bytes),
    )(q.astype(cd), k_proj, v_proj, wq_t, bq, wo_h, bo)


def _reference(q, k, v, params, *, h):
    """Pure-JAX f32 reference mirroring the PyTorch forward (eval, mask=None)."""
    B, S, D = q.shape
    d_k = D // h

    def lin(x, w, b):
        return x @ w.T + b

    Q = lin(q, params["wq"], params["bq"]).reshape(B, S, h, d_k).transpose(0, 2, 1, 3)
    K = lin(k, params["wk"], params["bk"]).reshape(B, S, h, d_k).transpose(0, 2, 1, 3)
    V = lin(v, params["wv"], params["bv"]).reshape(B, S, h, d_k).transpose(0, 2, 1, 3)

    scores = jnp.einsum("bhqd,bhkd->bhqk", Q, K) / math.sqrt(d_k)
    p = jax.nn.softmax(scores, axis=-1)
    ctx = jnp.einsum("bhqk,bhkd->bhqd", p, V)
    ctx = ctx.transpose(0, 2, 1, 3).reshape(B, S, D)
    return lin(ctx, params["wo"], params["bo"])


if __name__ == "__main__":
    B, S, D, H = 2, 8, 32, 4

    key = jax.random.PRNGKey(0)
    ks = jax.random.split(key, 11)
    scale = 1.0 / math.sqrt(D)

    params = {
        "wq": jax.random.uniform(ks[0], (D, D), jnp.float32, -scale, scale),
        "bq": jax.random.uniform(ks[1], (D,), jnp.float32, -scale, scale),
        "wk": jax.random.uniform(ks[2], (D, D), jnp.float32, -scale, scale),
        "bk": jax.random.uniform(ks[3], (D,), jnp.float32, -scale, scale),
        "wv": jax.random.uniform(ks[4], (D, D), jnp.float32, -scale, scale),
        "bv": jax.random.uniform(ks[5], (D,), jnp.float32, -scale, scale),
        "wo": jax.random.uniform(ks[6], (D, D), jnp.float32, -scale, scale),
        "bo": jax.random.uniform(ks[7], (D,), jnp.float32, -scale, scale),
    }

    q = jax.random.normal(ks[8], (B, S, D), jnp.float32)
    k = jax.random.normal(ks[9], (B, S, D), jnp.float32)
    v = jax.random.normal(ks[10], (B, S, D), jnp.float32)

    ref = _reference(q, k, v, params, h=H)

    # f32 compute path (tight tolerance; exact reciprocal + f32 exp).
    out_f32 = jax.block_until_ready(
        multi_headed_attention(q, k, v, params, h=H, compute_dtype=jnp.float32))
    assert out_f32.shape == (B, S, D)
    err_f32 = float(jnp.max(jnp.abs(out_f32 - ref)))
    assert jnp.allclose(out_f32, ref, atol=2e-3, rtol=2e-3), \
        f"f32 path mismatch, max|diff|={err_f32}"

    # bf16 compute path (MXU-native; f32 accumulation; bf16 exp; looser tol).
    out_bf16 = jax.block_until_ready(
        multi_headed_attention(q, k, v, params, h=H, compute_dtype=jnp.bfloat16))
    assert out_bf16.shape == (B, S, D)
    err_bf16 = float(jnp.max(jnp.abs(out_bf16 - ref)))
    assert jnp.allclose(out_bf16, ref, atol=5e-2, rtol=5e-2), \
        f"bf16 path mismatch, max|diff|={err_bf16}"

    print("KERNEL_OK")
</pallas_src>

<mosaic_0001>
module attributes {stable_mosaic.version = 11 : i64} {
  func.func @_kv_project_kernel(%arg0: i32, %arg1: i32, %arg2: memref<1x8x32xf32, #tpu.memory_space<vmem>>, %arg3: memref<1x8x32xf32, #tpu.memory_space<vmem>>, %arg4: memref<32x32xf32, #tpu.memory_space<vmem>>, %arg5: memref<1x32xf32, #tpu.memory_space<vmem>>, %arg6: memref<32x32xf32, #tpu.memory_space<vmem>>, %arg7: memref<1x32xf32, #tpu.memory_space<vmem>>, %arg8: memref<1x4x8x8xf32, #tpu.memory_space<vmem>>, %arg9: memref<1x4x8x8xf32, #tpu.memory_space<vmem>>) attributes {dimension_semantics = [#tpu.dimension_semantics<parallel>, #tpu.dimension_semantics<parallel>], iteration_bounds = array<i64: 2, 1>, scalar_prefetch = 0 : i64, scratch_operands = 0 : i64, tpu.core_type = #tpu.core_type<tc>, window_params = [{transform_indices = @transform_0, window_bounds = array<i64: 1, 8, 32>}, {transform_indices = @transform_1, window_bounds = array<i64: 1, 8, 32>}, {pipeline_mode = #tpu.pipeline_mode<synchronous>, transform_indices = @transform_2, window_bounds = array<i64: 32, 32>}, {pipeline_mode = #tpu.pipeline_mode<synchronous>, transform_indices = @transform_3, window_bounds = array<i64: 1, 32>}, {pipeline_mode = #tpu.pipeline_mode<synchronous>, transform_indices = @transform_4, window_bounds = array<i64: 32, 32>}, {pipeline_mode = #tpu.pipeline_mode<synchronous>, transform_indices = @transform_5, window_bounds = array<i64: 1, 32>}, {transform_indices = @transform_6, window_bounds = array<i64: 1, 4, 8, 8>}, {transform_indices = @transform_7, window_bounds = array<i64: 1, 4, 8, 8>}]} {
    %c0 = arith.constant 0 : index
    %c0_0 = arith.constant 0 : index
    %c0_1 = arith.constant 0 : index
    %0 = vector.load %arg2[%c0, %c0_0, %c0_1] : memref<1x8x32xf32, #tpu.memory_space<vmem>>, vector<1x8x32xf32>
    %1 = vector.shape_cast %0 : vector<1x8x32xf32> to vector<8x32xf32>
    %c0_2 = arith.constant 0 : index
    %c0_3 = arith.constant 0 : index
    %2 = vector.load %arg4[%c0_2, %c0_3] : memref<32x32xf32, #tpu.memory_space<vmem>>, vector<32x32xf32>
    %cst = arith.constant dense<0.000000e+00> : vector<8x32xf32>
    %3 = tpu.matmul %1, %2, %cst {dimension_numbers = #tpu.dot_dimension_numbers<[1], [0], [0], [1], [0, 0, 1, 1], [], []>} : vector<8x32xf32>, vector<32x32xf32>, vector<8x32xf32> -> vector<8x32xf32>
    %c0_4 = arith.constant 0 : index
    %c0_5 = arith.constant 0 : index
    %4 = vector.load %arg5[%c0_4, %c0_5] : memref<1x32xf32, #tpu.memory_space<vmem>>, vector<1x32xf32>
    %5 = vector.broadcast %4 : vector<1x32xf32> to vector<8x32xf32>
    %6 = arith.addf %3, %5 : vector<8x32xf32>
    %c0_6 = arith.constant 0 : index
    %c0_7 = arith.constant 0 : index
    %c0_8 = arith.constant 0 : index
    %7 = vector.load %arg3[%c0_6, %c0_7, %c0_8] : memref<1x8x32xf32, #tpu.memory_space<vmem>>, vector<1x8x32xf32>
    %8 = vector.shape_cast %7 : vector<1x8x32xf32> to vector<8x32xf32>
    %c0_9 = arith.constant 0 : index
    %c0_10 = arith.constant 0 : index
    %9 = vector.load %arg6[%c0_9, %c0_10] : memref<32x32xf32, #tpu.memory_space<vmem>>, vector<32x32xf32>
    %cst_11 = arith.constant dense<0.000000e+00> : vector<8x32xf32>
    %10 = tpu.matmul %8, %9, %cst_11 {dimension_numbers = #tpu.dot_dimension_numbers<[1], [0], [0], [1], [0, 0, 1, 1], [], []>} : vector<8x32xf32>, vector<32x32xf32>, vector<8x32xf32> -> vector<8x32xf32>
    %c0_12 = arith.constant 0 : index
    %c0_13 = arith.constant 0 : index
    %11 = vector.load %arg7[%c0_12, %c0_13] : memref<1x32xf32, #tpu.memory_space<vmem>>, vector<1x32xf32>
    %12 = vector.broadcast %11 : vector<1x32xf32> to vector<8x32xf32>
    %13 = arith.addf %10, %12 : vector<8x32xf32>
    %14 = vector.extract_strided_slice %6 {offsets = [0, 0], sizes = [8, 8], strides = [1, 1]} : vector<8x32xf32> to vector<8x8xf32>
    %c0_14 = arith.constant 0 : index
    %c0_15 = arith.constant 0 : index
    %c0_16 = arith.constant 0 : index
    %c0_17 = arith.constant 0 : index
    %15 = vector.load %arg8[%c0_14, %c0_15, %c0_16, %c0_17] : memref<1x4x8x8xf32, #tpu.memory_space<vmem>>, vector<1x1x8x8xf32>
    %16 = vector.shape_cast %15 : vector<1x1x8x8xf32> to vector<8x8xf32>
    %17 = vector.shape_cast %14 : vector<8x8xf32> to vector<1x1x8x8xf32>
    tpu.vector_store %arg8[%c0_14, %c0_15, %c0_16, %c0_17], %17 {strides = array<i32>} : memref<1x4x8x8xf32, #tpu.memory_space<vmem>>, vector<1x1x8x8xf32>,
    %18 = vector.extract_strided_slice %13 {offsets = [0, 0], sizes = [8, 8], strides = [1, 1]} : vector<8x32xf32> to vector<8x8xf32>
    %c0_18 = arith.constant 0 : index
    %c0_19 = arith.constant 0 : index
    %c0_20 = arith.constant 0 : index
    %c0_21 = arith.constant 0 : index
    %19 = vector.load %arg9[%c0_18, %c0_19, %c0_20, %c0_21] : memref<1x4x8x8xf32, #tpu.memory_space<vmem>>, vector<1x1x8x8xf32>
    %20 = vector.shape_cast %19 : vector<1x1x8x8xf32> to vector<8x8xf32>
    %21 = vector.shape_cast %18 : vector<8x8xf32> to vector<1x1x8x8xf32>
    tpu.vector_store %arg9[%c0_18, %c0_19, %c0_20, %c0_21], %21 {strides = array<i32>} : memref<1x4x8x8xf32, #tpu.memory_space<vmem>>, vector<1x1x8x8xf32>,
    %22 = vector.extract_strided_slice %6 {offsets = [0, 8], sizes = [8, 8], strides = [1, 1]} : vector<8x32xf32> to vector<8x8xf32>
    %c0_22 = arith.constant 0 : index
    %c1 = arith.constant 1 : index
    %c0_23 = arith.constant 0 : index
    %c0_24 = arith.constant 0 : index
    %23 = vector.load %arg8[%c0_22, %c1, %c0_23, %c0_24] : memref<1x4x8x8xf32, #tpu.memory_space<vmem>>, vector<1x1x8x8xf32>
    %24 = vector.shape_cast %23 : vector<1x1x8x8xf32> to vector<8x8xf32>
    %25 = vector.shape_cast %22 : vector<8x8xf32> to vector<1x1x8x8xf32>
    tpu.vector_store %arg8[%c0_22, %c1, %c0_23, %c0_24], %25 {strides = array<i32>} : memref<1x4x8x8xf32, #tpu.memory_space<vmem>>, vector<1x1x8x8xf32>,
    %26 = vector.extract_strided_slice %13 {offsets = [0, 8], sizes = [8, 8], strides = [1, 1]} : vector<8x32xf32> to vector<8x8xf32>
    %c0_25 = arith.constant 0 : index
    %c1_26 = arith.constant 1 : index
    %c0_27 = arith.constant 0 : index
    %c0_28 = arith.constant 0 : index
    %27 = vector.load %arg9[%c0_25, %c1_26, %c0_27, %c0_28] : memref<1x4x8x8xf32, #tpu.memory_space<vmem>>, vector<1x1x8x8xf32>
    %28 = vector.shape_cast %27 : vector<1x1x8x8xf32> to vector<8x8xf32>
    %29 = vector.shape_cast %26 : vector<8x8xf32> to vector<1x1x8x8xf32>
    tpu.vector_store %arg9[%c0_25, %c1_26, %c0_27, %c0_28], %29 {strides = array<i32>} : memref<1x4x8x8xf32, #tpu.memory_space<vmem>>, vector<1x1x8x8xf32>,
    %30 = vector.extract_strided_slice %6 {offsets = [0, 16], sizes = [8, 8], strides = [1, 1]} : vector<8x32xf32> to vector<8x8xf32>
    %c0_29 = arith.constant 0 : index
    %c2 = arith.constant 2 : index
    %c0_30 = arith.constant 0 : index
    %c0_31 = arith.constant 0 : index
    %31 = vector.load %arg8[%c0_29, %c2, %c0_30, %c0_31] : memref<1x4x8x8xf32, #tpu.memory_space<vmem>>, vector<1x1x8x8xf32>
    %32 = vector.shape_cast %31 : vector<1x1x8x8xf32> to vector<8x8xf32>
    %33 = vector.shape_cast %30 : vector<8x8xf32> to vector<1x1x8x8xf32>
    tpu.vector_store %arg8[%c0_29, %c2, %c0_30, %c0_31], %33 {strides = array<i32>} : memref<1x4x8x8xf32, #tpu.memory_space<vmem>>, vector<1x1x8x8xf32>,
    %34 = vector.extract_strided_slice %13 {offsets = [0, 16], sizes = [8, 8], strides = [1, 1]} : vector<8x32xf32> to vector<8x8xf32>
    %c0_32 = arith.constant 0 : index
    %c2_33 = arith.constant 2 : index
    %c0_34 = arith.constant 0 : index
    %c0_35 = arith.constant 0 : index
    %35 = vector.load %arg9[%c0_32, %c2_33, %c0_34, %c0_35] : memref<1x4x8x8xf32, #tpu.memory_space<vmem>>, vector<1x1x8x8xf32>
    %36 = vector.shape_cast %35 : vector<1x1x8x8xf32> to vector<8x8xf32>
    %37 = vector.shape_cast %34 : vector<8x8xf32> to vector<1x1x8x8xf32>
    tpu.vector_store %arg9[%c0_32, %c2_33, %c0_34, %c0_35], %37 {strides = array<i32>} : memref<1x4x8x8xf32, #tpu.memory_space<vmem>>, vector<1x1x8x8xf32>,
    %38 = vector.extract_strided_slice %6 {offsets = [0, 24], sizes = [8, 8], strides = [1, 1]} : vector<8x32xf32> to vector<8x8xf32>
    %c0_36 = arith.constant 0 : index
    %c3 = arith.constant 3 : index
    %c0_37 = arith.constant 0 : index
    %c0_38 = arith.constant 0 : index
    %39 = vector.load %arg8[%c0_36, %c3, %c0_37, %c0_38] : memref<1x4x8x8xf32, #tpu.memory_space<vmem>>, vector<1x1x8x8xf32>
    %40 = vector.shape_cast %39 : vector<1x1x8x8xf32> to vector<8x8xf32>
    %41 = vector.shape_cast %38 : vector<8x8xf32> to vector<1x1x8x8xf32>
    tpu.vector_store %arg8[%c0_36, %c3, %c0_37, %c0_38], %41 {strides = array<i32>} : memref<1x4x8x8xf32, #tpu.memory_space<vmem>>, vector<1x1x8x8xf32>,
    %42 = vector.extract_strided_slice %13 {offsets = [0, 24], sizes = [8, 8], strides = [1, 1]} : vector<8x32xf32> to vector<8x8xf32>
    %c0_39 = arith.constant 0 : index
    %c3_40 = arith.constant 3 : index
    %c0_41 = arith.constant 0 : index
    %c0_42 = arith.constant 0 : index
    %43 = vector.load %arg9[%c0_39, %c3_40, %c0_41, %c0_42] : memref<1x4x8x8xf32, #tpu.memory_space<vmem>>, vector<1x1x8x8xf32>
    %44 = vector.shape_cast %43 : vector<1x1x8x8xf32> to vector<8x8xf32>
    %45 = vector.shape_cast %42 : vector<8x8xf32> to vector<1x1x8x8xf32>
    tpu.vector_store %arg9[%c0_39, %c3_40, %c0_41, %c0_42], %45 {strides = array<i32>} : memref<1x4x8x8xf32, #tpu.memory_space<vmem>>, vector<1x1x8x8xf32>,
    return
  }
  func.func @transform_0(%arg0: i32, %arg1: i32) -> (i32, i32, i32) {
    %c0_i32 = arith.constant 0 : i32
    %c0_i32_0 = arith.constant 0 : i32
    return %arg0, %arg1, %c0_i32 : i32, i32, i32
  }
  func.func @transform_1(%arg0: i32, %arg1: i32) -> (i32, i32, i32) {
    %c0_i32 = arith.constant 0 : i32
    %c0_i32_0 = arith.constant 0 : i32
    return %arg0, %arg1, %c0_i32 : i32, i32, i32
  }
  func.func @transform_2(%arg0: i32, %arg1: i32) -> (i32, i32) {
    %c0_i32 = arith.constant 0 : i32
    %c0_i32_0 = arith.constant 0 : i32
    %c0_i32_1 = arith.constant 0 : i32
    return %c0_i32, %c0_i32_0 : i32, i32
  }
  func.func @transform_3(%arg0: i32, %arg1: i32) -> (i32, i32) {
    %c0_i32 = arith.constant 0 : i32
    %c0_i32_0 = arith.constant 0 : i32
    %c0_i32_1 = arith.constant 0 : i32
    return %c0_i32, %c0_i32_0 : i32, i32
  }
  func.func @transform_4(%arg0: i32, %arg1: i32) -> (i32, i32) {
    %c0_i32 = arith.constant 0 : i32
    %c0_i32_0 = arith.constant 0 : i32
    %c0_i32_1 = arith.constant 0 : i32
    return %c0_i32, %c0_i32_0 : i32, i32
  }
  func.func @transform_5(%arg0: i32, %arg1: i32) -> (i32, i32) {
    %c0_i32 = arith.constant 0 : i32
    %c0_i32_0 = arith.constant 0 : i32
    %c0_i32_1 = arith.constant 0 : i32
    return %c0_i32, %c0_i32_0 : i32, i32
  }
  func.func @transform_6(%arg0: i32, %arg1: i32) -> (i32, i32, i32, i32) {
    %c0_i32 = arith.constant 0 : i32
    %c0_i32_0 = arith.constant 0 : i32
    %c0_i32_1 = arith.constant 0 : i32
    return %arg0, %c0_i32, %arg1, %c0_i32_0 : i32, i32, i32, i32
  }
  func.func @transform_7(%arg0: i32, %arg1: i32) -> (i32, i32, i32, i32) {
    %c0_i32 = arith.constant 0 : i32
    %c0_i32_0 = arith.constant 0 : i32
    %c0_i32_1 = arith.constant 0 : i32
    return %arg0, %c0_i32, %arg1, %c0_i32_0 : i32, i32, i32, i32
  }
}

</mosaic_0001>

<llo_original>
// kernel: tpu_custom_call.1
$region0: #{tpu_custom_call.1}
  #allocation0 [shape = 'u32[]', space=smem, size = 0x4, offset = 0x4, fixed_abs, tag = 'smem constant byte address 0x4 - core index']
  #allocation1 [shape = 'u32[144,128]{1,0:T(1,128)}', space=vmem, size = 0x12000, scoped, tag = 'internal scratch']
  %s0 = inlined_call_operand.hbm [shape: f32[2,8,32], index: 0, kind: input, shape index: {}]
  %s1 = inlined_call_operand.hbm [shape: f32[2,8,32], index: 1, kind: input, shape index: {}]
  %s2 = inlined_call_operand.hbm [shape: f32[32,32], index: 2, kind: input, shape index: {}]
  %s3 = inlined_call_operand.vmem [shape: f32[1,32], index: 3, kind: input, shape index: {}]
  %s4 = inlined_call_operand.hbm [shape: f32[32,32], index: 4, kind: input, shape index: {}]
  %s5 = inlined_call_operand.vmem [shape: f32[1,32], index: 5, kind: input, shape index: {}]
  %s6 = inlined_call_operand.hbm [shape: f32[2,4,8,8], index: 6, kind: output, shape index: {0}]
  %s7 = inlined_call_operand.hbm [shape: f32[2,4,8,8], index: 7, kind: output, shape index: {1}]
  %8 = xla_tuple %s6, %s7
  %s9 = sld [smem:[#allocation0]]
  $region81: #{tpu_custom_call.1} parent=0
    _
  %s11 = ssub.s32 1, %s9
  %s12 = scalar_select 0, %s11, %s9
  $region1: #{tpu_custom_call.1} parent=0
    #allocation2 [shape = 'u8[8192]{0}', space=vmem, size = 0x2000, scoped, tag = 'input window, operand 0']
    #allocation3 [shape = 's32[2]{0}', space=sflag, size = 0x8, scoped, tag = 'scoped memory for tpu_custom_call.1']
    #allocation4 [shape = 's32[2]{0}', space=sflag, size = 0x8, scoped, tag = 'scoped memory for tpu_custom_call.1']
    #allocation5 [shape = 'u8[8192]{0}', space=vmem, size = 0x2000, scoped, tag = 'input window, operand 1']
    #allocation6 [shape = 's32[2]{0}', space=sflag, size = 0x8, scoped, tag = 'scoped memory for tpu_custom_call.1']
    #allocation7 [shape = 'u8[16384]{0}', space=vmem, size = 0x4000, scoped, tag = 'input window, operand 2, single buffered']
    #allocation8 [shape = 'u8[16384]{0}', space=vmem, size = 0x4000, scoped, tag = 'input window, operand 4, single buffered']
    #allocation9 [shape = 's32[1]{0}', space=sflag, size = 0x4, scoped, tag = 'scoped memory for tpu_custom_call.1']
    #allocation10 [shape = 'u8[32768]{0}', space=vmem, size = 0x8000, scoped, tag = 'output window, operand 0']
    #allocation11 [shape = 'u8[32768]{0}', space=vmem, size = 0x8000, scoped, tag = 'output window, operand 1']
    #allocation12 [shape = 's32[2]{0}', space=sflag, size = 0x8, scoped, tag = 'scoped memory for tpu_custom_call.1']
    %13 = vsyncpa [#allocation3], 0
    %s14 = scalar_lea.sflag [#allocation3], 1
    %15 = vsyncpa %s14, 0
    %16 = vsyncpa [#allocation6], 0
    %s17 = scalar_lea.sflag [#allocation6], 1
    %18 = vsyncpa %s17, 0
    %19 = vsyncpa [#allocation9], 0
    %20 = vsyncpa [#allocation4], 0
    %s21 = scalar_lea.sflag [#allocation4], 1
    %22 = vsyncpa %s21, 0
    %23 = vsyncpa [#allocation12], 0
    %s24 = scalar_lea.sflag [#allocation12], 1
    %25 = vsyncpa %s24, 0
    loop: start=0, step=1, limit=4
    $region2: #{tpu_custom_call.1} parent=1 // loop_pre_header
      _
    $region3: #{tpu_custom_call.1} parent=1 // loop_header
      %s27 = sphi 0, %s31
      %p28 = scmp.ge.s32.totalorder %s27, 4
      %s34 = sphi 0, %s46
      %s35 = sphi 0, %s42
      %s36 = sphi 0, %s34
      %s37 = sphi 0, %s35
      %s38 = sphi 0, %s36
      %s39 = sphi 0, %s37
      %s51 = sphi 0, %s53
      %s54 = sphi 0, %s51
      %s55 = sphi 0, %s54
      %s71 = sphi 0, %s55
      %s79 = sphi 0, %s81
      %s82 = sphi 0, %s79
      %s83 = sphi 0, %s82
      %s99 = sphi 0, %s83
      %s103 = sphi 0, %s103
      %s105 = sphi 0, %s103
      %s106 = sphi 0, %s105
      %s120 = sphi 0, %s106
      %s124 = sphi 0, %s124
      %s126 = sphi 0, %s124
      %s127 = sphi 0, %s126
      %s141 = sphi 0, %s127
      %s145 = sphi 0, %s145
      %s147 = sphi 0, %s145
      %s148 = sphi 0, %s147
      %s162 = sphi 0, %s148
      %s166 = sphi 0, %s166
      %s168 = sphi 0, %s166
      %s169 = sphi 0, %s168
      %s183 = sphi 0, %s169
      %s191 = sphi 0, %s193
      %s194 = sphi 0, %s191
      %s195 = sphi 0, %s194
      %s211 = sphi 0, %s195
      %s219 = sphi 0, %s221
      %s222 = sphi 0, %s219
      %s223 = sphi 0, %s222
      %s239 = sphi 0, %s223
    $region4: #{tpu_custom_call.1} parent=1 // loop_header_branch
      %30 = sbr.rel (%p28) target = $region8
    $region5: #{tpu_custom_call.1} parent=1 // loop_body
      %s32 = ssub.s32 %s27, 1
      %s33 = ssub.s32 %s27, 2
      %s40 = sadd.s32 1, %s35
      %p41 = scmp.ge.s32.totalorder %s40, 1
      %s42 = scalar_select %p41, 0, %s40
      %s43 = sadd.s32 1, %s34
      %s44 = scalar_select %p41, %s43, %s34
      %p45 = scmp.ge.s32.totalorder %s44, 2
      %s46 = scalar_select %p45, 0, %s44
      %s47 = ssub.s32 %s34, %s46
      %s48 = ssub.s32 %s35, %s42
      %s49 = sor.u32 %s47, %s48
      %p50 = scmp.eq.s32.totalorder %s49, 0
      %s52 = sadd.s32 %s51, 1
      %s53 = scalar_select %p50, %s51, %s52
      %p56 = pneg %p50
      %p57 = scmp.eq.s32.totalorder %s27, 1
      %p58 = por %p56, %p57
      %p59 = scmp.ne.s32.totalorder %s51, %s54
      %p60 = scmp.eq.s32.totalorder %s27, 0
      %p61 = por %p59, %p60
      %p62 = scmp.ne.s32.totalorder %s51, %s54
      %p63 = scmp.eq.s32.totalorder %s32, 1
      %p64 = por %p62, %p63
      %p65 = scmp.ne.s32.totalorder %s54, %s55
      %p66 = scmp.eq.s32.totalorder %s32, 0
      %p67 = por %p65, %p66
      %p68 = scmp.ne.s32.totalorder %s54, %s55
      %p69 = scmp.eq.s32.totalorder %s33, 1
      %p70 = por %p68, %p69
      %p72 = scmp.ne.s32.totalorder %s55, %s71
      %p73 = scmp.eq.s32.totalorder %s33, 0
      %p74 = por %p72, %p73
      %s75 = ssub.s32 %s34, %s46
      %s76 = ssub.s32 %s35, %s42
      %s77 = sor.u32 %s75, %s76
      %p78 = scmp.eq.s32.totalorder %s77, 0
      %s80 = sadd.s32 %s79, 1
      %s81 = scalar_select %p78, %s79, %s80
      %p84 = pneg %p78
      %p85 = scmp.eq.s32.totalorder %s27, 1
      %p86 = por %p84, %p85
      %p87 = scmp.ne.s32.totalorder %s79, %s82
      %p88 = scmp.eq.s32.totalorder %s27, 0
      %p89 = por %p87, %p88
      %p90 = scmp.ne.s32.totalorder %s79, %s82
      %p91 = scmp.eq.s32.totalorder %s32, 1
      %p92 = por %p90, %p91
      %p93 = scmp.ne.s32.totalorder %s82, %s83
      %p94 = scmp.eq.s32.totalorder %s32, 0
      %p95 = por %p93, %p94
      %p96 = scmp.ne.s32.totalorder %s82, %s83
      %p97 = scmp.eq.s32.totalorder %s33, 1
      %p98 = por %p96, %p97
      %p100 = scmp.ne.s32.totalorder %s83, %s99
      %p101 = scmp.eq.s32.totalorder %s33, 0
      %p102 = por %p100, %p101
      %s104 = sadd.s32 %s103, 1
      %p107 = scmp.eq.s32.totalorder %s27, 1
      %p108 = scmp.ne.s32.totalorder %s103, %s105
      %p109 = scmp.eq.s32.totalorder %s27, 0
      %p110 = por %p108, %p109
      %p111 = scmp.ne.s32.totalorder %s103, %s105
      %p112 = scmp.eq.s32.totalorder %s32, 1
      %p113 = por %p111, %p112
      %p114 = scmp.ne.s32.totalorder %s105, %s106
      %p115 = scmp.eq.s32.totalorder %s32, 0
      %p116 = por %p114, %p115
      %p117 = scmp.ne.s32.totalorder %s105, %s106
      %p118 = scmp.eq.s32.totalorder %s33, 1
      %p119 = por %p117, %p118
      %p121 = scmp.ne.s32.totalorder %s106, %s120
      %p122 = scmp.eq.s32.totalorder %s33, 0
      %p123 = por %p121, %p122
      %s125 = sadd.s32 %s124, 1
      %p128 = scmp.eq.s32.totalorder %s27, 1
      %p129 = scmp.ne.s32.totalorder %s124, %s126
      %p130 = scmp.eq.s32.totalorder %s27, 0
      %p131 = por %p129, %p130
      %p132 = scmp.ne.s32.totalorder %s124, %s126
      %p133 = scmp.eq.s32.totalorder %s32, 1
      %p134 = por %p132, %p133
      %p135 = scmp.ne.s32.totalorder %s126, %s127
      %p136 = scmp.eq.s32.totalorder %s32, 0
      %p137 = por %p135, %p136
      %p138 = scmp.ne.s32.totalorder %s126, %s127
      %p139 = scmp.eq.s32.totalorder %s33, 1
      %p140 = por %p138, %p139
      %p142 = scmp.ne.s32.totalorder %s127, %s141
      %p143 = scmp.eq.s32.totalorder %s33, 0
      %p144 = por %p142, %p143
      %s146 = sadd.s32 %s145, 1
      %p149 = scmp.eq.s32.totalorder %s27, 1
      %p150 = scmp.ne.s32.totalorder %s145, %s147
      %p151 = scmp.eq.s32.totalorder %s27, 0
      %p152 = por %p150, %p151
      %p153 = scmp.ne.s32.totalorder %s145, %s147
      %p154 = scmp.eq.s32.totalorder %s32, 1
      %p155 = por %p153, %p154
      %p156 = scmp.ne.s32.totalorder %s147, %s148
      %p157 = scmp.eq.s32.totalorder %s32, 0
      %p158 = por %p156, %p157
      %p159 = scmp.ne.s32.totalorder %s147, %s148
      %p160 = scmp.eq.s32.totalorder %s33, 1
      %p161 = por %p159, %p160
      %p163 = scmp.ne.s32.totalorder %s148, %s162
      %p164 = scmp.eq.s32.totalorder %s33, 0
      %p165 = por %p163, %p164
      %s167 = sadd.s32 %s166, 1
      %p170 = scmp.eq.s32.totalorder %s27, 1
      %p171 = scmp.ne.s32.totalorder %s166, %s168
      %p172 = scmp.eq.s32.totalorder %s27, 0
      %p173 = por %p171, %p172
      %p174 = scmp.ne.s32.totalorder %s166, %s168
      %p175 = scmp.eq.s32.totalorder %s32, 1
      %p176 = por %p174, %p175
      %p177 = scmp.ne.s32.totalorder %s168, %s169
      %p178 = scmp.eq.s32.totalorder %s32, 0
      %p179 = por %p177, %p178
      %p180 = scmp.ne.s32.totalorder %s168, %s169
      %p181 = scmp.eq.s32.totalorder %s33, 1
      %p182 = por %p180, %p181
      %p184 = scmp.ne.s32.totalorder %s169, %s183
      %p185 = scmp.eq.s32.totalorder %s33, 0
      %p186 = por %p184, %p185
      %s187 = ssub.s32 %s34, %s46
      %s188 = ssub.s32 %s35, %s42
      %s189 = sor.u32 %s187, %s188
      %p190 = scmp.eq.s32.totalorder %s189, 0
      %s192 = sadd.s32 %s191, 1
      %s193 = scalar_select %p190, %s191, %s192
      %p196 = pneg %p190
      %p197 = scmp.eq.s32.totalorder %s27, 1
      %p198 = por %p196, %p197
      %p199 = scmp.ne.s32.totalorder %s191, %s194
      %p200 = scmp.eq.s32.totalorder %s27, 0
      %p201 = por %p199, %p200
      %p202 = scmp.ne.s32.totalorder %s191, %s194
      %p203 = scmp.eq.s32.totalorder %s32, 1
      %p204 = por %p202, %p203
      %p205 = scmp.ne.s32.totalorder %s194, %s195
      %p206 = scmp.eq.s32.totalorder %s32, 0
      %p207 = por %p205, %p206
      %p208 = scmp.ne.s32.totalorder %s194, %s195
      %p209 = scmp.eq.s32.totalorder %s33, 1
      %p210 = por %p208, %p209
      %p212 = scmp.ne.s32.totalorder %s195, %s211
      %p213 = scmp.eq.s32.totalorder %s33, 0
      %p214 = por %p212, %p213
      %s215 = ssub.s32 %s34, %s46
      %s216 = ssub.s32 %s35, %s42
      %s217 = sor.u32 %s215, %s216
      %p218 = scmp.eq.s32.totalorder %s217, 0
      %s220 = sadd.s32 %s219, 1
      %s221 = scalar_select %p218, %s219, %s220
      %p224 = pneg %p218
      %p225 = scmp.eq.s32.totalorder %s27, 1
      %p226 = por %p224, %p225
      %p227 = scmp.ne.s32.totalorder %s219, %s222
      %p228 = scmp.eq.s32.totalorder %s27, 0
      %p229 = por %p227, %p228
      %p230 = scmp.ne.s32.totalorder %s219, %s222
      %p231 = scmp.eq.s32.totalorder %s32, 1
      %p232 = por %p230, %p231
      %p233 = scmp.ne.s32.totalorder %s222, %s223
      %p234 = scmp.eq.s32.totalorder %s32, 0
      %p235 = por %p233, %p234
      %p236 = scmp.ne.s32.totalorder %s222, %s223
      %p237 = scmp.eq.s32.totalorder %s33, 1
      %p238 = por %p236, %p237
      %p240 = scmp.ne.s32.totalorder %s223, %s239
      %p241 = scmp.eq.s32.totalorder %s33, 0
      %p242 = por %p240, %p241
      %p243 = scmp.le.s32.totalorder 1, %s27
      %p244 = scmp.lt.s32.totalorder %s27, 3
      %p245 = pnand %p243, %p244
      %p246 = pneg %p245
      // Predicated region
      $region9: #{tpu_custom_call.1} parent=5 // pred_check
        _
      $region10: #{tpu_custom_call.1} parent=5 // pred_check_branch
        %248 = sbr.rel (%p245) target = $region12
      $region11: #{tpu_custom_call.1} parent=5 // pred_region
        %s249 = ssub.s32 %s27, 1
        // Predicated region
        $region13: #{tpu_custom_call.1} parent=11 // pred_check
          %p250 = pneg %p116
        $region14: #{tpu_custom_call.1} parent=11 // pred_check_branch
          %252 = sbr.rel (%p250) target = $region16
        $region15: #{tpu_custom_call.1} parent=11 // pred_region
          %s254 = ssub.s32 512, 512
          %255 = vsyncadd [#allocation6], %s254
          %s256 = sshll.u32 [#allocation7], 4
          %s257 = int_to_ptr.vmem [resolvable:$true] %s256
          %262 = dma.hbm_to_vmem [thread:$0]  %s2, 512, %s257, [#allocation6], 128, 128, 8
        $region16: #{tpu_custom_call.1} parent=11 // pred_fallthru
          _
        // Predicated region
        $region17: #{tpu_custom_call.1} parent=11 // pred_check
          %p263 = pneg %p137
        $region18: #{tpu_custom_call.1} parent=11 // pred_check_branch
          %265 = sbr.rel (%p263) target = $region20
        $region19: #{tpu_custom_call.1} parent=11 // pred_region
          _
        $region20: #{tpu_custom_call.1} parent=11 // pred_fallthru
          _
        // Predicated region
        $region21: #{tpu_custom_call.1} parent=11 // pred_check
          %p266 = pneg %p158
        $region22: #{tpu_custom_call.1} parent=11 // pred_check_branch
          %268 = sbr.rel (%p266) target = $region24
        $region23: #{tpu_custom_call.1} parent=11 // pred_region
          %s270 = ssub.s32 512, 512
          %271 = vsyncadd [#allocation9], %s270
          %s272 = sshll.u32 [#allocation8], 4
          %s273 = int_to_ptr.vmem [resolvable:$true] %s272
          %278 = dma.hbm_to_vmem [thread:$0]  %s4, 512, %s273, [#allocation9], 128, 128, 8
        $region24: #{tpu_custom_call.1} parent=11 // pred_fallthru
          _
        // Predicated region
        $region25: #{tpu_custom_call.1} parent=11 // pred_check
          %p279 = pneg %p179
        $region26: #{tpu_custom_call.1} parent=11 // pred_check_branch
          %281 = sbr.rel (%p279) target = $region28
        $region27: #{tpu_custom_call.1} parent=11 // pred_region
          _
        $region28: #{tpu_custom_call.1} parent=11 // pred_fallthru
          _
      $region12: #{tpu_custom_call.1} parent=5 // pred_fallthru
        _
      %p282 = scmp.lt.s32.totalorder %s27, 2
      // Predicated region
      $region29: #{tpu_custom_call.1} parent=5 // pred_check
        %p283 = pneg %p282
      $region30: #{tpu_custom_call.1} parent=5 // pred_check_branch
        %285 = sbr.rel (%p283) target = $region32
      $region31: #{tpu_custom_call.1} parent=5 // pred_region
        // Predicated region
        $region33: #{tpu_custom_call.1} parent=31 // pred_check
          %p286 = pneg %p61
        $region34: #{tpu_custom_call.1} parent=31 // pred_check_branch
          %288 = sbr.rel (%p286) target = $region36
        $region35: #{tpu_custom_call.1} parent=31 // pred_region
          %s289 = sand.u32 %s51, 1
          %s290 = scalar_lea.sflag [#allocation3], %s289
          %s291 = sand.u32 %s51, 1
          %s292 = smul.addr %s291, 8
          %s293 = scalar_lea.vmem [#allocation2], %s292
          %s295 = ssub.s32 128, 128
          %296 = vsyncadd %s290, %s295
          %s297 = sadd.s32 %s35, %s34
          %s298 = smul.addr %s297, 128
          %s299 = scalar_lea.hbm %s0, %s298
          %s301 = sshll.u32 %s293, 4
          %s302 = int_to_ptr.vmem [resolvable:$true] %s301
          %304 = dma.hbm_to_vmem [thread:$0]  %s299, 128, %s302, %s290
        $region36: #{tpu_custom_call.1} parent=31 // pred_fallthru
          _
        // Predicated region
        $region37: #{tpu_custom_call.1} parent=31 // pred_check
          %p305 = pneg %p89
        $region38: #{tpu_custom_call.1} parent=31 // pred_check_branch
          %307 = sbr.rel (%p305) target = $region40
        $region39: #{tpu_custom_call.1} parent=31 // pred_region
          %s308 = sand.u32 %s27, 1
          %s309 = scalar_lea.sflag [#allocation6], %s308
          %s310 = sand.u32 %s79, 1
          %s311 = smul.addr %s310, 8
          %s312 = scalar_lea.vmem [#allocation5], %s311
          %s314 = ssub.s32 128, 128
          %315 = vsyncadd %s309, %s314
          %s316 = sadd.s32 %s35, %s34
          %s317 = smul.addr %s316, 128
          %s318 = scalar_lea.hbm %s1, %s317
          %s320 = sshll.u32 %s312, 4
          %s321 = int_to_ptr.vmem [resolvable:$true] %s320
          %323 = dma.hbm_to_vmem [thread:$0]  %s318, 128, %s321, %s309
        $region40: #{tpu_custom_call.1} parent=31 // pred_fallthru
          _
      $region32: #{tpu_custom_call.1} parent=5 // pred_fallthru
        _
      %p324 = scmp.le.s32.totalorder 1, %s27
      %p325 = scmp.lt.s32.totalorder %s27, 3
      %p326 = pnand %p324, %p325
      %p327 = pneg %p326
      // Predicated region
      $region41: #{tpu_custom_call.1} parent=5 // pred_check
        _
      $region42: #{tpu_custom_call.1} parent=5 // pred_check_branch
        %329 = sbr.rel (%p326) target = $region44
      $region43: #{tpu_custom_call.1} parent=5 // pred_region
        %s330 = ssub.s32 %s27, 1
        %s331 = sand.u32 %s54, 1
        %s332 = scalar_lea.sflag [#allocation3], %s331
        %s333 = sand.u32 %s54, 1
        %s334 = smul.addr %s333, 8
        %s335 = scalar_lea.vmem [#allocation2], %s334
        // Predicated region
        $region45: #{tpu_custom_call.1} parent=43 // pred_check
          %p336 = pneg %p67
        $region46: #{tpu_custom_call.1} parent=43 // pred_check_branch
          %338 = sbr.rel (%p336) target = $region48
        $region47: #{tpu_custom_call.1} parent=43 // pred_region
          %339 = dma.done %s332, 128
        $region48: #{tpu_custom_call.1} parent=43 // pred_fallthru
          _
        %s340 = sand.u32 %s32, 1
        %s341 = scalar_lea.sflag [#allocation6], %s340
        %s342 = sand.u32 %s82, 1
        %s343 = smul.addr %s342, 8
        %s344 = scalar_lea.vmem [#allocation5], %s343
        // Predicated region
        $region49: #{tpu_custom_call.1} parent=43 // pred_check
          %p345 = pneg %p95
        $region50: #{tpu_custom_call.1} parent=43 // pred_check_branch
          %347 = sbr.rel (%p345) target = $region52
        $region51: #{tpu_custom_call.1} parent=43 // pred_region
          %348 = dma.done %s341, 128
        $region52: #{tpu_custom_call.1} parent=43 // pred_fallthru
          _
        // Predicated region
        $region53: #{tpu_custom_call.1} parent=43 // pred_check
          %p349 = pneg %p116
        $region54: #{tpu_custom_call.1} parent=43 // pred_check_branch
          %351 = sbr.rel (%p349) target = $region56
        $region55: #{tpu_custom_call.1} parent=43 // pred_region
          %352 = dma.done [#allocation6], 512
        $region56: #{tpu_custom_call.1} parent=43 // pred_fallthru
          _
        // Predicated region
        $region57: #{tpu_custom_call.1} parent=43 // pred_check
          %p353 = pneg %p158
        $region58: #{tpu_custom_call.1} parent=43 // pred_check_branch
          %355 = sbr.rel (%p353) target = $region60
        $region59: #{tpu_custom_call.1} parent=43 // pred_region
          %356 = dma.done [#allocation9], 512
        $region60: #{tpu_custom_call.1} parent=43 // pred_fallthru
          _
        %s357 = sand.u32 %s54, 1
        %s358 = scalar_lea.sflag [#allocation3], %s357
        %s359 = sand.u32 %s54, 1
        %s360 = smul.addr %s359, 8
        %s361 = scalar_lea.vmem [#allocation2], %s360
        %p362 = pneg %p67
        %p363 = pneg %p64
        %s364 = sand.u32 %s32, 1
        %s365 = scalar_lea.sflag [#allocation6], %s364
        %s366 = sand.u32 %s82, 1
        %s367 = smul.addr %s366, 8
        %s368 = scalar_lea.vmem [#allocation5], %s367
        %p369 = pneg %p95
        %p370 = pneg %p92
        %p371 = pneg %p116
        %p372 = pneg %p113
        %p373 = pneg %p137
        %p374 = pneg %p134
        %p375 = pneg %p158
        %p376 = pneg %p155
        %p377 = pneg %p179
        %p378 = pneg %p176
        %p379 = pneg %p207
        %p380 = pneg %p204
        %s381 = sand.u32 %s194, 1
        %s382 = scalar_lea.sflag [#allocation4], %s381
        %s383 = sand.u32 %s194, 1
        %s384 = smul.addr %s383, 32
        %s385 = scalar_lea.vmem [#allocation10], %s384
        %p386 = pneg %p235
        %p387 = pneg %p232
        %s388 = sand.u32 %s222, 1
        %s389 = scalar_lea.sflag [#allocation12], %s388
        %s390 = sand.u32 %s222, 1
        %s391 = smul.addr %s390, 32
        %s392 = scalar_lea.vmem [#allocation11], %s391
        %v393 = vld [vmem:[%s335] sm:$0xff]
        %v394 = vld [vmem:[#allocation7] sm:$0xff]
        %v395 = vld [vmem:[#allocation7 + $0x8] sm:$0xff]
        %v396 = vld [vmem:[#allocation7 + $0x10] sm:$0xff]
        %v397 = vld [vmem:[#allocation7 + $0x18] sm:$0xff]
        %v398 = vld [vmem:[%s3] sm:$0x1]
        %v400 = vlaneseq
        %v401 = vshrl.u32 %v400, 7
        %v402 = vsub.s32 0, %v401
        %v403 = vrot.slane %v398, %v402
        %vm405 = vcmask 261120
        %v407 = vsel %vm405, %v393, 0
        %409 = vmatprep.subr.mxu0 0.0
        %410 = vmatpush1.msra.mxu0 %v394
        %411 = vmatprep.subr.mxu0 0.0
        %412 = vmatpush1.msra.mxu0 %v395
        %413 = vmatprep.subr.mxu0 0.0
        %414 = vmatpush1.msra.mxu0 %v396
        %415 = vmatprep.subr.mxu0 0.0
        %416 = vmatpush1.msra.mxu0 %v397
        %417 = vmatprep.subr.mxu0 0.0
        %418 = vmatpush1.msra.mxu0 0.0
        %419 = vmatprep.subr.mxu0 0.0
        %420 = vmatpush1.msra.mxu0 0.0
        %421 = vmatprep.subr.mxu0 0.0
        %422 = vmatpush1.msra.mxu0 0.0
        %423 = vmatprep.subr.mxu0 0.0
        %424 = vmatpush1.msra.mxu0 0.0
        %425 = vmatprep.subr.mxu0 0.0
        %426 = vmatpush1.msra.mxu0 0.0
        %427 = vmatprep.subr.mxu0 0.0
        %428 = vmatpush1.msra.mxu0 0.0
        %429 = vmatprep.subr.mxu0 0.0
        %430 = vmatpush1.msra.mxu0 0.0
        %431 = vmatprep.subr.mxu0 0.0
        %432 = vmatpush1.msra.mxu0 0.0
        %433 = vmatprep.subr.mxu0 0.0
        %434 = vmatpush1.msra.mxu0 0.0
        %435 = vmatprep.subr.mxu0 0.0
        %436 = vmatpush1.msra.mxu0 0.0
        %437 = vmatprep.subr.mxu0 0.0
        %438 = vmatpush1.msra.mxu0 0.0
        %439 = vmatprep.subr.mxu0 0.0
        %440 = vmatpush1.msra.mxu0 0.0
        %441 = vmatprep.subr.mxu0 0.0
        %442 = vmatpush1.msra.mxu0 0.0
        %443 = vmatprep.subr.mxu0 0.0
        %444 = vmatpush1.msra.mxu0 0.0
        %445 = vmatprep.subr.mxu0 0.0
        %446 = vmatpush1.msra.mxu0 0.0
        %447 = vmatprep.subr.mxu0 0.0
        %448 = vmatpush1.msra.mxu0 0.0
        %449 = vmatprep.subr.mxu0 0.0
        %450 = vmatpush1.msra.mxu0 0.0
        %451 = vmatprep.subr.mxu0 0.0
        %452 = vmatpush1.msra.mxu0 0.0
        %453 = vmatprep.subr.mxu0 0.0
        %454 = vmatpush1.msra.mxu0 0.0
        %455 = vmatprep.subr.mxu0 0.0
        %456 = vmatpush1.msra.mxu0 0.0
        %457 = vmatprep.subr.mxu0 0.0
        %458 = vmatpush1.msra.mxu0 0.0
        %459 = vmatprep.subr.mxu0 0.0
        %460 = vmatpush1.msra.mxu0 0.0
        %461 = vmatprep.subr.mxu0 0.0
        %462 = vmatpush1.msra.mxu0 0.0
        %463 = vmatprep.subr.mxu0 0.0
        %464 = vmatpush1.msra.mxu0 0.0
        %465 = vmatprep.subr.mxu0 0.0
        %466 = vmatpush1.msra.mxu0 0.0
        %467 = vmatprep.subr.mxu0 0.0
        %468 = vmatpush1.msra.mxu0 0.0
        %469 = vmatprep.subr.mxu0 0.0
        %470 = vmatpush1.msra.mxu0 0.0
        %471 = vmatprep.subr.mxu0 0.0
        %472 = vmatpush1.msra.mxu0 0.0
        %473 = vmatprep.mubr.f32.mxu0 0.0
        %474 = vmatmul.mubr.f32.gmra.mrb[0].mxu0 %v407
        %v475 = vpop.f32.mrb[0].mxu0
        %v476 = vadd.f32 %v403, %v475
        %v477 = vpop.f32.mrb[0].mxu0
        %478 = vdwg.mxu0
        %v479 = vld [vmem:[%s344] sm:$0xff]
        %v480 = vld [vmem:[#allocation8] sm:$0xff]
        %v481 = vld [vmem:[#allocation8 + $0x8] sm:$0xff]
        %v482 = vld [vmem:[#allocation8 + $0x10] sm:$0xff]
        %v483 = vld [vmem:[#allocation8 + $0x18] sm:$0xff]
        %v484 = vld [vmem:[%s5] sm:$0x1]
        %v486 = vlaneseq
        %v487 = vshrl.u32 %v486, 7
        %v488 = vsub.s32 0, %v487
        %v489 = vrot.slane %v484, %v488
        %v492 = vsel %vm405, %v479, 0
        %494 = vmatprep.subr.mxu0 0.0
        %495 = vmatpush1.msra.mxu0 %v480
        %496 = vmatprep.subr.mxu0 0.0
        %497 = vmatpush1.msra.mxu0 %v481
        %498 = vmatprep.subr.mxu0 0.0
        %499 = vmatpush1.msra.mxu0 %v482
        %500 = vmatprep.subr.mxu0 0.0
        %501 = vmatpush1.msra.mxu0 %v483
        %502 = vmatprep.subr.mxu0 0.0
        %503 = vmatpush1.msra.mxu0 0.0
        %504 = vmatprep.subr.mxu0 0.0
        %505 = vmatpush1.msra.mxu0 0.0
        %506 = vmatprep.subr.mxu0 0.0
        %507 = vmatpush1.msra.mxu0 0.0
        %508 = vmatprep.subr.mxu0 0.0
        %509 = vmatpush1.msra.mxu0 0.0
        %510 = vmatprep.subr.mxu0 0.0
        %511 = vmatpush1.msra.mxu0 0.0
        %512 = vmatprep.subr.mxu0 0.0
        %513 = vmatpush1.msra.mxu0 0.0
        %514 = vmatprep.subr.mxu0 0.0
        %515 = vmatpush1.msra.mxu0 0.0
        %516 = vmatprep.subr.mxu0 0.0
        %517 = vmatpush1.msra.mxu0 0.0
        %518 = vmatprep.subr.mxu0 0.0
        %519 = vmatpush1.msra.mxu0 0.0
        %520 = vmatprep.subr.mxu0 0.0
        %521 = vmatpush1.msra.mxu0 0.0
        %522 = vmatprep.subr.mxu0 0.0
        %523 = vmatpush1.msra.mxu0 0.0
        %524 = vmatprep.subr.mxu0 0.0
        %525 = vmatpush1.msra.mxu0 0.0
        %526 = vmatprep.subr.mxu0 0.0
        %527 = vmatpush1.msra.mxu0 0.0
        %528 = vmatprep.subr.mxu0 0.0
        %529 = vmatpush1.msra.mxu0 0.0
        %530 = vmatprep.subr.mxu0 0.0
        %531 = vmatpush1.msra.mxu0 0.0
        %532 = vmatprep.subr.mxu0 0.0
        %533 = vmatpush1.msra.mxu0 0.0
        %534 = vmatprep.subr.mxu0 0.0
        %535 = vmatpush1.msra.mxu0 0.0
        %536 = vmatprep.subr.mxu0 0.0
        %537 = vmatpush1.msra.mxu0 0.0
        %538 = vmatprep.subr.mxu0 0.0
        %539 = vmatpush1.msra.mxu0 0.0
        %540 = vmatprep.subr.mxu0 0.0
        %541 = vmatpush1.msra.mxu0 0.0
        %542 = vmatprep.subr.mxu0 0.0
        %543 = vmatpush1.msra.mxu0 0.0
        %544 = vmatprep.subr.mxu0 0.0
        %545 = vmatpush1.msra.mxu0 0.0
        %546 = vmatprep.subr.mxu0 0.0
        %547 = vmatpush1.msra.mxu0 0.0
        %548 = vmatprep.subr.mxu0 0.0
        %549 = vmatpush1.msra.mxu0 0.0
        %550 = vmatprep.subr.mxu0 0.0
        %551 = vmatpush1.msra.mxu0 0.0
        %552 = vmatprep.subr.mxu0 0.0
        %553 = vmatpush1.msra.mxu0 0.0
        %554 = vmatprep.subr.mxu0 0.0
        %555 = vmatpush1.msra.mxu0 0.0
        %556 = vmatprep.subr.mxu0 0.0
        %557 = vmatpush1.msra.mxu0 0.0
        %558 = vmatprep.mubr.f32.mxu0 0.0
        %559 = vmatmul.mubr.f32.gmra.mrb[0].mxu0 %v492
        %v560 = vpop.f32.mrb[0].mxu0
        %v561 = vadd.f32 %v489, %v560
        %v562 = vpop.f32.mrb[0].mxu0
        %563 = vdwg.mxu0
        %vm564 = vcmask 64512
        %565 = vst.msk [vmem:[%s385] sm:$0xff] %vm564, %v476
        %566 = vst.msk [vmem:[%s392] sm:$0xff] %vm564, %v561
        %568 = vrot.lane.b32.xlu0 %v476, 120
        %v569 = vpop.permute.xlu0 %568
        %s571 = scalar_lea.vmem %s385, 8 [#allocation10]
        %572 = vst.msk [vmem:[%s571] sm:$0xff] %vm564, %v569
        %574 = vrot.lane.b32.xlu0 %v561, 120
        %v575 = vpop.permute.xlu0 %574
        %s577 = scalar_lea.vmem %s392, 8 [#allocation11]
        %578 = vst.msk [vmem:[%s577] sm:$0xff] %vm564, %v575
        %579 = vrot.lane.b32.xlu0 %v476, 112
        %v580 = vpop.permute.xlu0 %579
        %s582 = scalar_lea.vmem %s385, 16 [#allocation10]
        %583 = vst.msk [vmem:[%s582] sm:$0xff] %vm564, %v580
        %584 = vrot.lane.b32.xlu0 %v561, 112
        %v585 = vpop.permute.xlu0 %584
        %s587 = scalar_lea.vmem %s392, 16 [#allocation11]
        %588 = vst.msk [vmem:[%s587] sm:$0xff] %vm564, %v585
        %589 = vrot.lane.b32.xlu0 %v476, 104
        %v590 = vpop.permute.xlu0 %589
        %s592 = scalar_lea.vmem %s385, 24 [#allocation10]
        %593 = vst.msk [vmem:[%s592] sm:$0xff] %vm564, %v590
        %594 = vrot.lane.b32.xlu0 %v561, 104
        %v595 = vpop.permute.xlu0 %594
        %s597 = scalar_lea.vmem %s392, 24 [#allocation11]
        %598 = vst.msk [vmem:[%s597] sm:$0xff] %vm564, %v595
        %s599 = sand.u32 %s194, 1
        %s600 = scalar_lea.sflag [#allocation4], %s599
        %s601 = sand.u32 %s194, 1
        %s602 = smul.addr %s601, 32
        %s603 = scalar_lea.vmem [#allocation10], %s602
        %s604 = sand.u32 %s222, 1
        %s605 = scalar_lea.sflag [#allocation12], %s604
        %s606 = sand.u32 %s222, 1
        %s607 = smul.addr %s606, 32
        %s608 = scalar_lea.vmem [#allocation11], %s607
        // Predicated region
        $region61: #{tpu_custom_call.1} parent=43 // pred_check
          %p609 = pneg %p204
        $region62: #{tpu_custom_call.1} parent=43 // pred_check_branch
          %611 = sbr.rel (%p609) target = $region64
        $region63: #{tpu_custom_call.1} parent=43 // pred_region
          %s613 = ssub.s32 512, 512
          %614 = vsyncadd %s600, %s613
          %s615 = smul.addr %s36, 4
          %s616 = sadd.s32 %s37, %s615
          %s617 = smul.addr %s616, 128
          %s618 = scalar_lea.hbm %s6, %s617
          %s619 = sshll.u32 %s603, 4
          %s620 = int_to_ptr.vmem [resolvable:$true] %s619
          %625 = dma.vmem_to_hbm [thread:$0]  %s620, 512, %s618, %s600, 128, 128, 8
        $region64: #{tpu_custom_call.1} parent=43 // pred_fallthru
          _
        // Predicated region
        $region65: #{tpu_custom_call.1} parent=43 // pred_check
          %p626 = pneg %p232
        $region66: #{tpu_custom_call.1} parent=43 // pred_check_branch
          %628 = sbr.rel (%p626) target = $region68
        $region67: #{tpu_custom_call.1} parent=43 // pred_region
          %s630 = ssub.s32 512, 512
          %631 = vsyncadd %s605, %s630
          %s632 = smul.addr %s36, 4
          %s633 = sadd.s32 %s37, %s632
          %s634 = smul.addr %s633, 128
          %s635 = scalar_lea.hbm %s7, %s634
          %s636 = sshll.u32 %s608, 4
          %s637 = int_to_ptr.vmem [resolvable:$true] %s636
          %642 = dma.vmem_to_hbm [thread:$0]  %s637, 512, %s635, %s605, 128, 128, 8
        $region68: #{tpu_custom_call.1} parent=43 // pred_fallthru
          _
      $region44: #{tpu_custom_call.1} parent=5 // pred_fallthru
        _
      %p643 = scmp.le.s32.totalorder 2, %s27
      // Predicated region
      $region69: #{tpu_custom_call.1} parent=5 // pred_check
        %p644 = pneg %p643
      $region70: #{tpu_custom_call.1} parent=5 // pred_check_branch
        %646 = sbr.rel (%p644) target = $region72
      $region71: #{tpu_custom_call.1} parent=5 // pred_region
        %s647 = ssub.s32 %s27, 2
        // Predicated region
        $region73: #{tpu_custom_call.1} parent=71 // pred_check
          %p648 = pneg %p210
        $region74: #{tpu_custom_call.1} parent=71 // pred_check_branch
          %650 = sbr.rel (%p648) target = $region76
        $region75: #{tpu_custom_call.1} parent=71 // pred_region
          %s651 = sand.u32 %s195, 1
          %s652 = scalar_lea.sflag [#allocation4], %s651
          %s653 = sand.u32 %s195, 1
          %s654 = smul.addr %s653, 32
          %s655 = scalar_lea.vmem [#allocation10], %s654
          %656 = dma.done %s652, 512
        $region76: #{tpu_custom_call.1} parent=71 // pred_fallthru
          _
        // Predicated region
        $region77: #{tpu_custom_call.1} parent=71 // pred_check
          %p657 = pneg %p238
        $region78: #{tpu_custom_call.1} parent=71 // pred_check_branch
          %659 = sbr.rel (%p657) target = $region80
        $region79: #{tpu_custom_call.1} parent=71 // pred_region
          %s660 = sand.u32 %s223, 1
          %s661 = scalar_lea.sflag [#allocation12], %s660
          %s662 = sand.u32 %s223, 1
          %s663 = smul.addr %s662, 32
          %s664 = scalar_lea.vmem [#allocation11], %s663
          %665 = dma.done %s661, 512
        $region80: #{tpu_custom_call.1} parent=71 // pred_fallthru
          _
      $region72: #{tpu_custom_call.1} parent=5 // pred_fallthru
        _
    $region6: #{tpu_custom_call.1} parent=1 // loop_footer
      %s31 = sadd.s32 1, %s27
    $region7: #{tpu_custom_call.1} parent=1 // loop_footer_branch
      %26 = sbr.rel target = $region3
    $region8: #{tpu_custom_call.1} parent=1 // loop_exit
      _
    %666 = vsyncpa [#allocation3], 1
    %s667 = scalar_lea.sflag [#allocation3], 1
    %668 = vsyncpa %s667, 1
    %669 = vsyncpa [#allocation6], 1
    %s670 = scalar_lea.sflag [#allocation6], 1
    %671 = vsyncpa %s670, 1
    %672 = vsyncpa [#allocation9], 1
    %673 = vsyncpa [#allocation4], 1
    %s674 = scalar_lea.sflag [#allocation4], 1
    %675 = vsyncpa %s674, 1
    %676 = vsyncpa [#allocation12], 1
    %s677 = scalar_lea.sflag [#allocation12], 1
    %678 = vsyncpa %s677, 1

</llo_original>
